<compile_context>
chip_gen: v5e
topology: v5e:2x2
jax: 0.10.0
libtpu: 0.0.40
codegen_flags: <defaults>
</compile_context>

<pallas_src>
import functools

import jax
import jax.numpy as jnp
from jax.experimental import pallas as pl
from jax.experimental.pallas import tpu as pltpu

_NUM_GROUPS = 4
_TARGET_STEP_BYTES = 1 << 20        # aim for >= ~1 MiB of data moved per grid step


def _round_up(x, m):
    return ((x + m - 1) // m) * m


def _sublane_multiple(dtype):
    """Sublane tile: 8 for 32-bit, 16 for 16-bit, 32 for 8-bit dtypes."""
    bits = jnp.dtype(dtype).itemsize * 8
    return max(8, 256 // bits)


@functools.lru_cache(maxsize=None)
def _vmem_plan():
    """Generation-aware (block_budget_bytes, vmem_limit_bytes)."""
    vmem_phys = 64 << 20                           # conservative default (v7x)
    try:
        info = pltpu.get_tpu_info()
        v = getattr(info, "vmem_capacity_bytes", None)
        if v:
            vmem_phys = int(v)
    except Exception:
        pass
    vmem_limit = min((vmem_phys * 3) // 4, 64 << 20)   # 48 MiB v7x, 64 MiB v5e/v6e
    block_budget = vmem_limit // 2                      # double-buffered block cap
    return block_budget, vmem_limit


def _plan_tiles(N, HW, CB, C, feat_itemsize, unc_itemsize, block_budget):
    """Choose (BN batch-block, hw_tile, n_hw)."""
    # VMEM footprint per lane column per batch item (single buffer, sublane-padded).
    per_lane = ((_round_up(CB, 8) + _round_up(C, 8)) * feat_itemsize
                + 8 * unc_itemsize)
    max_lanes = max(128, block_budget // (2 * per_lane))

    if HW <= max_lanes:
        hw_tile, n_hw = HW, 1
        # Batch-block so each step moves ~_TARGET_STEP_BYTES (VMEM permitting).
        step_bytes = max(1, hw_tile * per_lane)
        bn = max(1, _TARGET_STEP_BYTES // step_bytes)
        bn = min(bn, max(1, block_budget // (2 * step_bytes)))
        bn = min(bn, N)
    else:
        # Balanced lane-aligned tiles instead of max-size tiles + tiny remainder.
        max_aligned = max(128, (max_lanes // 128) * 128)
        n_tiles = pl.cdiv(HW, max_aligned)
        hw_tile = min(_round_up(pl.cdiv(HW, n_tiles), 128), max_aligned)
        n_hw = pl.cdiv(HW, hw_tile)
        bn = 1

    # v7x has 2 TensorCores: guarantee >= 2 "parallel" grid steps when possible.
    if pl.cdiv(N, bn) * n_hw < 2:
        if N >= 2:
            bn = pl.cdiv(N, 2)
        elif HW >= 256:
            hw_tile = _round_up(pl.cdiv(HW, 2), 128)
            n_hw = pl.cdiv(HW, hw_tile)
    return bn, hw_tile, n_hw


def _make_kernel(uncertain: bool, refeat_channel: int, out_channels: int):
    R = refeat_channel
    C4 = _NUM_GROUPS * R

    def kernel(feat_ref, unc_ref, out_ref):
        # feat_ref: (BN, CB, T), unc_ref: (BN, 4, T), out_ref: (BN, C, T)
        u = unc_ref[...]
        if not uncertain:                      # compile-time branch
            u = 1.0 - u
        for g in range(_NUM_GROUPS):           # static unroll over the 4 groups
            prod = feat_ref[:, g * R:(g + 1) * R, :] * u[:, g:g + 1, :]
            out_ref[:, g * R:(g + 1) * R, :] = prod.astype(out_ref.dtype)
        if out_channels > C4:                  # zero the tail channels in-kernel
            out_ref[:, C4:, :] = jnp.zeros(
                (out_ref.shape[0], out_channels - C4, out_ref.shape[2]),
                out_ref.dtype)

    return kernel


@functools.partial(jax.jit, static_argnames=("uncertain", "refeat_channel"))
def uncertainty_attentive_reg(feature, uncertainties, *, uncertain: bool,
                              refeat_channel: int):
    N, C, H, W = feature.shape
    R = refeat_channel
    C4 = _NUM_GROUPS * R
    HW = H * W
    assert C >= C4, "feature must have at least 4*refeat_channel channels"
    assert uncertainties.shape == (N, _NUM_GROUPS, H, W)

    # Contiguous reshapes only — no host-side channel slice, no concat pad.
    feat = feature.reshape(N, C, HW)
    unc = uncertainties.reshape(N, _NUM_GROUPS, HW)

    feat_isz = jnp.dtype(feature.dtype).itemsize
    unc_isz = jnp.dtype(uncertainties.dtype).itemsize

    # Feature-input block covers only the used channels, rounded up to the
    # dtype's sublane multiple (capped at the full extent C, which is always
    # a legal block dim).
    sub = _sublane_multiple(feature.dtype)
    CB = min(C, _round_up(C4, sub))

    block_budget, vmem_limit = _vmem_plan()
    BN, hw_tile, n_hw = _plan_tiles(N, HW, CB, C, feat_isz, unc_isz,
                                    block_budget)
    grid = (pl.cdiv(N, BN), n_hw)

    out = pl.pallas_call(
        _make_kernel(uncertain, R, C),
        out_shape=jax.ShapeDtypeStruct((N, C, HW), feature.dtype),
        grid_spec=pltpu.PrefetchScalarGridSpec(
            num_scalar_prefetch=0,
            grid=grid,
            in_specs=[
                pl.BlockSpec((BN, CB, hw_tile), lambda n, t: (n, 0, t)),
                pl.BlockSpec((BN, _NUM_GROUPS, hw_tile), lambda n, t: (n, 0, t)),
            ],
            out_specs=pl.BlockSpec((BN, C, hw_tile), lambda n, t: (n, 0, t)),
        ),
        compiler_params=pltpu.CompilerParams(
            dimension_semantics=("parallel", "parallel"),
            vmem_limit_bytes=vmem_limit),
    )(feat, unc)

    return out.reshape(N, C, H, W)


def _reference(feature, uncertainties, uncertain, refeat_channel):
    """Pure-JAX reference mirroring the PyTorch loop."""
    R = refeat_channel
    u = uncertainties if uncertain else 1.0 - uncertainties
    out = jnp.zeros_like(feature)
    for g in range(_NUM_GROUPS):
        out = out.at[:, g * R:(g + 1) * R].set(
            feature[:, g * R:(g + 1) * R] * u[:, g:g + 1])
    return out


if __name__ == "__main__":
    key = jax.random.PRNGKey(0)

    # (N, C, H, W, R, uncertain) — covers C == 4R, C > 4R (zero tail), both
    # branches of the compile-time (1 - u) flag, and the batch-blocked path
    # with a small (sub-128) spatial map.
    cases = [
        (2, 32, 16, 16, 8, True),
        (2, 40, 16, 16, 8, False),
        (4, 32, 8, 8, 8, True),
    ]

    ok = True
    for case_idx, (N, C, H, W, R, uncertain) in enumerate(cases):
        k1, k2, key = jax.random.split(key, 3)
        feature = jax.random.normal(k1, (N, C, H, W), dtype=jnp.float32)
        uncertainties = jax.random.uniform(k2, (N, 4, H, W), dtype=jnp.float32)

        out = uncertainty_attentive_reg(
            feature, uncertainties, uncertain=uncertain, refeat_channel=R)
        out = jax.block_until_ready(out)

        ref = _reference(feature, uncertainties, uncertain, R)
        if out.shape != feature.shape or not jnp.allclose(
                out, ref, atol=1e-6, rtol=1e-6):
            ok = False
            print(f"MISMATCH in case {case_idx}")

    if ok:
        print("KERNEL_OK")
</pallas_src>

<mosaic_0001>
module attributes {stable_mosaic.version = 11 : i64} {
  func.func @kernel(%arg0: i32, %arg1: i32, %arg2: memref<1x32x256xf32, #tpu.memory_space<vmem>>, %arg3: memref<1x4x256xf32, #tpu.memory_space<vmem>>, %arg4: memref<1x32x256xf32, #tpu.memory_space<vmem>>) attributes {dimension_semantics = [#tpu.dimension_semantics<parallel>, #tpu.dimension_semantics<parallel>], iteration_bounds = array<i64: 2, 1>, scalar_prefetch = 0 : i64, scratch_operands = 0 : i64, tpu.core_type = #tpu.core_type<tc>, window_params = [{transform_indices = @transform_0, window_bounds = array<i64: 1, 32, 256>}, {transform_indices = @transform_1, window_bounds = array<i64: 1, 4, 256>}, {transform_indices = @transform_2, window_bounds = array<i64: 1, 32, 256>}]} {
    %c0 = arith.constant 0 : index
    %c0_0 = arith.constant 0 : index
    %c0_1 = arith.constant 0 : index
    %0 = vector.load %arg3[%c0, %c0_0, %c0_1] : memref<1x4x256xf32, #tpu.memory_space<vmem>>, vector<1x4x256xf32>
    %c0_2 = arith.constant 0 : index
    %c0_3 = arith.constant 0 : index
    %c0_4 = arith.constant 0 : index
    %1 = vector.load %arg2[%c0_2, %c0_3, %c0_4] : memref<1x32x256xf32, #tpu.memory_space<vmem>>, vector<1x8x256xf32>
    %2 = vector.extract_strided_slice %0 {offsets = [0, 0, 0], sizes = [1, 1, 256], strides = [1, 1, 1]} : vector<1x4x256xf32> to vector<1x1x256xf32>
    %3 = vector.broadcast %2 : vector<1x1x256xf32> to vector<1x8x256xf32>
    %4 = arith.mulf %1, %3 : vector<1x8x256xf32>
    %c0_5 = arith.constant 0 : index
    %c0_6 = arith.constant 0 : index
    %c0_7 = arith.constant 0 : index
    %5 = vector.load %arg4[%c0_5, %c0_6, %c0_7] : memref<1x32x256xf32, #tpu.memory_space<vmem>>, vector<1x8x256xf32>
    tpu.vector_store %arg4[%c0_5, %c0_6, %c0_7], %4 {strides = array<i32>} : memref<1x32x256xf32, #tpu.memory_space<vmem>>, vector<1x8x256xf32>,
    %c0_8 = arith.constant 0 : index
    %c8 = arith.constant 8 : index
    %c0_9 = arith.constant 0 : index
    %6 = vector.load %arg2[%c0_8, %c8, %c0_9] : memref<1x32x256xf32, #tpu.memory_space<vmem>>, vector<1x8x256xf32>
    %7 = vector.extract_strided_slice %0 {offsets = [0, 1, 0], sizes = [1, 1, 256], strides = [1, 1, 1]} : vector<1x4x256xf32> to vector<1x1x256xf32>
    %8 = vector.broadcast %7 : vector<1x1x256xf32> to vector<1x8x256xf32>
    %9 = arith.mulf %6, %8 : vector<1x8x256xf32>
    %c0_10 = arith.constant 0 : index
    %c8_11 = arith.constant 8 : index
    %c0_12 = arith.constant 0 : index
    %10 = vector.load %arg4[%c0_10, %c8_11, %c0_12] : memref<1x32x256xf32, #tpu.memory_space<vmem>>, vector<1x8x256xf32>
    tpu.vector_store %arg4[%c0_10, %c8_11, %c0_12], %9 {strides = array<i32>} : memref<1x32x256xf32, #tpu.memory_space<vmem>>, vector<1x8x256xf32>,
    %c0_13 = arith.constant 0 : index
    %c16 = arith.constant 16 : index
    %c0_14 = arith.constant 0 : index
    %11 = vector.load %arg2[%c0_13, %c16, %c0_14] : memref<1x32x256xf32, #tpu.memory_space<vmem>>, vector<1x8x256xf32>
    %12 = vector.extract_strided_slice %0 {offsets = [0, 2, 0], sizes = [1, 1, 256], strides = [1, 1, 1]} : vector<1x4x256xf32> to vector<1x1x256xf32>
    %13 = vector.broadcast %12 : vector<1x1x256xf32> to vector<1x8x256xf32>
    %14 = arith.mulf %11, %13 : vector<1x8x256xf32>
    %c0_15 = arith.constant 0 : index
    %c16_16 = arith.constant 16 : index
    %c0_17 = arith.constant 0 : index
    %15 = vector.load %arg4[%c0_15, %c16_16, %c0_17] : memref<1x32x256xf32, #tpu.memory_space<vmem>>, vector<1x8x256xf32>
    tpu.vector_store %arg4[%c0_15, %c16_16, %c0_17], %14 {strides = array<i32>} : memref<1x32x256xf32, #tpu.memory_space<vmem>>, vector<1x8x256xf32>,
    %c0_18 = arith.constant 0 : index
    %c24 = arith.constant 24 : index
    %c0_19 = arith.constant 0 : index
    %16 = vector.load %arg2[%c0_18, %c24, %c0_19] : memref<1x32x256xf32, #tpu.memory_space<vmem>>, vector<1x8x256xf32>
    %17 = vector.extract_strided_slice %0 {offsets = [0, 3, 0], sizes = [1, 1, 256], strides = [1, 1, 1]} : vector<1x4x256xf32> to vector<1x1x256xf32>
    %18 = vector.broadcast %17 : vector<1x1x256xf32> to vector<1x8x256xf32>
    %19 = arith.mulf %16, %18 : vector<1x8x256xf32>
    %c0_20 = arith.constant 0 : index
    %c24_21 = arith.constant 24 : index
    %c0_22 = arith.constant 0 : index
    %20 = vector.load %arg4[%c0_20, %c24_21, %c0_22] : memref<1x32x256xf32, #tpu.memory_space<vmem>>, vector<1x8x256xf32>
    tpu.vector_store %arg4[%c0_20, %c24_21, %c0_22], %19 {strides = array<i32>} : memref<1x32x256xf32, #tpu.memory_space<vmem>>, vector<1x8x256xf32>,
    return
  }
  func.func @transform_0(%arg0: i32, %arg1: i32) -> (i32, i32, i32) {
    %c0_i32 = arith.constant 0 : i32
    %c0_i32_0 = arith.constant 0 : i32
    return %arg0, %c0_i32, %arg1 : i32, i32, i32
  }
  func.func @transform_1(%arg0: i32, %arg1: i32) -> (i32, i32, i32) {
    %c0_i32 = arith.constant 0 : i32
    %c0_i32_0 = arith.constant 0 : i32
    return %arg0, %c0_i32, %arg1 : i32, i32, i32
  }
  func.func @transform_2(%arg0: i32, %arg1: i32) -> (i32, i32, i32) {
    %c0_i32 = arith.constant 0 : i32
    %c0_i32_0 = arith.constant 0 : i32
    return %arg0, %c0_i32, %arg1 : i32, i32, i32
  }
}

</mosaic_0001>

<llo_original>
// kernel: uncertainty_attentive_reg.1
$region0: #{uncertainty_attentive_reg.1}
  #allocation0 [shape = 'u32[]', space=smem, size = 0x4, offset = 0x4, fixed_abs, tag = 'smem constant byte address 0x4 - core index']
  #allocation1 [shape = 'u32[72,128]{1,0:T(1,128)}', space=vmem, size = 0x9000, scoped, tag = 'internal scratch']
  %s0 = inlined_call_operand.vmem [shape: f32[2,32,256], index: 0, kind: input, shape index: {}]
  %s1 = inlined_call_operand.vmem [shape: f32[2,4,256], index: 1, kind: input, shape index: {}]
  %s2 = inlined_call_operand.vmem [shape: f32[2,32,256], index: 2, kind: output, shape index: {}]
  %s3 = sld [smem:[#allocation0]]
  $region41: #{uncertainty_attentive_reg.1} parent=0
    _
  %s5 = ssub.s32 1, %s3
  %s6 = scalar_select 0, %s5, %s3
  loop: start=0, step=1, limit=4
  $region2: #{uncertainty_attentive_reg.1} parent=0 // loop_pre_header
    _
  $region3: #{uncertainty_attentive_reg.1} parent=0 // loop_header
    %s8 = sphi 0, %s12
    %p9 = scmp.ge.s32.totalorder %s8, 4
    %s15 = sphi 0, %s27
    %s16 = sphi 0, %s23
    %s17 = sphi 0, %s15
    %s18 = sphi 0, %s16
    %s19 = sphi 0, %s17
    %s20 = sphi 0, %s18
    %s32 = sphi 0, %s34
    %s35 = sphi 0, %s32
    %s36 = sphi 0, %s35
    %s52 = sphi 0, %s36
    %s60 = sphi 0, %s62
    %s63 = sphi 0, %s60
    %s64 = sphi 0, %s63
    %s80 = sphi 0, %s64
    %s88 = sphi 0, %s90
    %s91 = sphi 0, %s88
    %s92 = sphi 0, %s91
    %s108 = sphi 0, %s92
  $region4: #{uncertainty_attentive_reg.1} parent=0 // loop_header_branch
    %11 = sbr.rel (%p9) target = $region8
  $region5: #{uncertainty_attentive_reg.1} parent=0 // loop_body
    %s13 = ssub.s32 %s8, 1
    %s14 = ssub.s32 %s8, 2
    %s21 = sadd.s32 1, %s16
    %p22 = scmp.ge.s32.totalorder %s21, 1
    %s23 = scalar_select %p22, 0, %s21
    %s24 = sadd.s32 1, %s15
    %s25 = scalar_select %p22, %s24, %s15
    %p26 = scmp.ge.s32.totalorder %s25, 2
    %s27 = scalar_select %p26, 0, %s25
    %s28 = ssub.s32 %s15, %s27
    %s29 = ssub.s32 %s16, %s23
    %s30 = sor.u32 %s28, %s29
    %p31 = scmp.eq.s32.totalorder %s30, 0
    %s33 = sadd.s32 %s32, 1
    %s34 = scalar_select %p31, %s32, %s33
    %p37 = pneg %p31
    %p38 = scmp.eq.s32.totalorder %s8, 1
    %p39 = por %p37, %p38
    %p40 = scmp.ne.s32.totalorder %s32, %s35
    %p41 = scmp.eq.s32.totalorder %s8, 0
    %p42 = por %p40, %p41
    %p43 = scmp.ne.s32.totalorder %s32, %s35
    %p44 = scmp.eq.s32.totalorder %s13, 1
    %p45 = por %p43, %p44
    %p46 = scmp.ne.s32.totalorder %s35, %s36
    %p47 = scmp.eq.s32.totalorder %s13, 0
    %p48 = por %p46, %p47
    %p49 = scmp.ne.s32.totalorder %s35, %s36
    %p50 = scmp.eq.s32.totalorder %s14, 1
    %p51 = por %p49, %p50
    %p53 = scmp.ne.s32.totalorder %s36, %s52
    %p54 = scmp.eq.s32.totalorder %s14, 0
    %p55 = por %p53, %p54
    %s56 = ssub.s32 %s15, %s27
    %s57 = ssub.s32 %s16, %s23
    %s58 = sor.u32 %s56, %s57
    %p59 = scmp.eq.s32.totalorder %s58, 0
    %s61 = sadd.s32 %s60, 1
    %s62 = scalar_select %p59, %s60, %s61
    %p65 = pneg %p59
    %p66 = scmp.eq.s32.totalorder %s8, 1
    %p67 = por %p65, %p66
    %p68 = scmp.ne.s32.totalorder %s60, %s63
    %p69 = scmp.eq.s32.totalorder %s8, 0
    %p70 = por %p68, %p69
    %p71 = scmp.ne.s32.totalorder %s60, %s63
    %p72 = scmp.eq.s32.totalorder %s13, 1
    %p73 = por %p71, %p72
    %p74 = scmp.ne.s32.totalorder %s63, %s64
    %p75 = scmp.eq.s32.totalorder %s13, 0
    %p76 = por %p74, %p75
    %p77 = scmp.ne.s32.totalorder %s63, %s64
    %p78 = scmp.eq.s32.totalorder %s14, 1
    %p79 = por %p77, %p78
    %p81 = scmp.ne.s32.totalorder %s64, %s80
    %p82 = scmp.eq.s32.totalorder %s14, 0
    %p83 = por %p81, %p82
    %s84 = ssub.s32 %s15, %s27
    %s85 = ssub.s32 %s16, %s23
    %s86 = sor.u32 %s84, %s85
    %p87 = scmp.eq.s32.totalorder %s86, 0
    %s89 = sadd.s32 %s88, 1
    %s90 = scalar_select %p87, %s88, %s89
    %p93 = pneg %p87
    %p94 = scmp.eq.s32.totalorder %s8, 1
    %p95 = por %p93, %p94
    %p96 = scmp.ne.s32.totalorder %s88, %s91
    %p97 = scmp.eq.s32.totalorder %s8, 0
    %p98 = por %p96, %p97
    %p99 = scmp.ne.s32.totalorder %s88, %s91
    %p100 = scmp.eq.s32.totalorder %s13, 1
    %p101 = por %p99, %p100
    %p102 = scmp.ne.s32.totalorder %s91, %s92
    %p103 = scmp.eq.s32.totalorder %s13, 0
    %p104 = por %p102, %p103
    %p105 = scmp.ne.s32.totalorder %s91, %s92
    %p106 = scmp.eq.s32.totalorder %s14, 1
    %p107 = por %p105, %p106
    %p109 = scmp.ne.s32.totalorder %s92, %s108
    %p110 = scmp.eq.s32.totalorder %s14, 0
    %p111 = por %p109, %p110
    %p112 = scmp.le.s32.totalorder 1, %s8
    %p113 = scmp.lt.s32.totalorder %s8, 3
    %p114 = pnand %p112, %p113
    %p115 = pneg %p114
    // Predicated region
    $region9: #{uncertainty_attentive_reg.1} parent=5 // pred_check
      _
    $region10: #{uncertainty_attentive_reg.1} parent=5 // pred_check_branch
      %117 = sbr.rel (%p114) target = $region12
    $region11: #{uncertainty_attentive_reg.1} parent=5 // pred_region
      %s118 = ssub.s32 %s8, 1
    $region12: #{uncertainty_attentive_reg.1} parent=5 // pred_fallthru
      _
    %p119 = scmp.lt.s32.totalorder %s8, 2
    // Predicated region
    $region13: #{uncertainty_attentive_reg.1} parent=5 // pred_check
      %p120 = pneg %p119
    $region14: #{uncertainty_attentive_reg.1} parent=5 // pred_check_branch
      %122 = sbr.rel (%p120) target = $region16
    $region15: #{uncertainty_attentive_reg.1} parent=5 // pred_region
      // Predicated region
      $region17: #{uncertainty_attentive_reg.1} parent=15 // pred_check
        %p123 = pneg %p42
      $region18: #{uncertainty_attentive_reg.1} parent=15 // pred_check_branch
        %125 = sbr.rel (%p123) target = $region20
      $region19: #{uncertainty_attentive_reg.1} parent=15 // pred_region
        %s126 = smul.u32 2, %s16
        %p127 = scmp.lt.s32.totalorder %s15, 1
        %s128 = scalar_select %p127, %s15, 1
        %p129 = scmp.lt.s32.totalorder %s126, 1
        %s130 = scalar_select %p129, %s126, 1
        %s131 = smul.addr %s128, 8
        %s132 = sadd.s32 %s130, %s131
        %s133 = smul.addr %s132, 8
        %s134 = scalar_lea.vmem %s0, %s133
        %s135 = smul.u32 2, %s16
      $region20: #{uncertainty_attentive_reg.1} parent=15 // pred_fallthru
        _
      // Predicated region
      $region21: #{uncertainty_attentive_reg.1} parent=15 // pred_check
        %p136 = pneg %p70
      $region22: #{uncertainty_attentive_reg.1} parent=15 // pred_check_branch
        %138 = sbr.rel (%p136) target = $region24
      $region23: #{uncertainty_attentive_reg.1} parent=15 // pred_region
        %s139 = smul.u32 2, %s16
        %p140 = scmp.lt.s32.totalorder %s15, 1
        %s141 = scalar_select %p140, %s15, 1
        %p142 = scmp.lt.s32.totalorder %s139, 1
        %s143 = scalar_select %p142, %s139, 1
        %s144 = smul.addr %s141, 2
        %s145 = sadd.s32 %s143, %s144
        %s146 = smul.addr %s145, 4
        %s147 = scalar_lea.vmem %s1, %s146
        %s148 = smul.u32 2, %s16
      $region24: #{uncertainty_attentive_reg.1} parent=15 // pred_fallthru
        _
    $region16: #{uncertainty_attentive_reg.1} parent=5 // pred_fallthru
      _
    %p149 = scmp.le.s32.totalorder 1, %s8
    %p150 = scmp.lt.s32.totalorder %s8, 3
    %p151 = pnand %p149, %p150
    %p152 = pneg %p151
    // Predicated region
    $region25: #{uncertainty_attentive_reg.1} parent=5 // pred_check
      _
    $region26: #{uncertainty_attentive_reg.1} parent=5 // pred_check_branch
      %154 = sbr.rel (%p151) target = $region28
    $region27: #{uncertainty_attentive_reg.1} parent=5 // pred_region
      %s155 = ssub.s32 %s8, 1
      %s156 = smul.u32 2, %s18
      %p157 = scmp.lt.s32.totalorder %s17, 1
      %s158 = scalar_select %p157, %s17, 1
      %p159 = scmp.lt.s32.totalorder %s156, 1
      %s160 = scalar_select %p159, %s156, 1
      %s161 = smul.addr %s158, 8
      %s162 = sadd.s32 %s160, %s161
      %s163 = smul.addr %s162, 8
      %s164 = scalar_lea.vmem %s0, %s163
      %p165 = pneg %p48
      %p166 = pneg %p45
      %s167 = smul.u32 2, %s18
      %p168 = scmp.lt.s32.totalorder %s17, 1
      %s169 = scalar_select %p168, %s17, 1
      %p170 = scmp.lt.s32.totalorder %s167, 1
      %s171 = scalar_select %p170, %s167, 1
      %s172 = smul.addr %s169, 2
      %s173 = sadd.s32 %s171, %s172
      %s174 = smul.addr %s173, 4
      %s175 = scalar_lea.vmem %s1, %s174
      %p176 = pneg %p76
      %p177 = pneg %p73
      %p178 = pneg %p104
      %p179 = pneg %p101
      %s180 = smul.u32 2, %s18
      %p181 = scmp.lt.s32.totalorder %s17, 1
      %s182 = scalar_select %p181, %s17, 1
      %p183 = scmp.lt.s32.totalorder %s180, 1
      %s184 = scalar_select %p183, %s180, 1
      %s185 = smul.addr %s182, 8
      %s186 = sadd.s32 %s184, %s185
      %s187 = smul.addr %s186, 8
      %s188 = scalar_lea.vmem %s2, %s187
      %s189 = smul.u32 2, %s18
      %p190 = scmp.lt.s32.totalorder %s17, 1
      %s191 = scalar_select %p190, %s17, 1
      %p192 = scmp.lt.s32.totalorder %s189, 1
      %s193 = scalar_select %p192, %s189, 1
      %s194 = smul.addr %s191, 8
      %s195 = sadd.s32 %s193, %s194
      %s196 = smul.addr %s195, 8
      %s197 = scalar_lea.vmem %s0, %s196
      %s198 = smul.u32 2, %s18
      %s199 = smul.u32 2, %s18
      %p200 = scmp.lt.s32.totalorder %s17, 1
      %s201 = scalar_select %p200, %s17, 1
      %p202 = scmp.lt.s32.totalorder %s199, 1
      %s203 = scalar_select %p202, %s199, 1
      %s204 = smul.addr %s201, 2
      %s205 = sadd.s32 %s203, %s204
      %s206 = smul.addr %s205, 4
      %s207 = scalar_lea.vmem %s1, %s206
      %s208 = smul.u32 2, %s18
      %s209 = smul.u32 2, %s18
      %p210 = scmp.lt.s32.totalorder %s17, 1
      %s211 = scalar_select %p210, %s17, 1
      %p212 = scmp.lt.s32.totalorder %s209, 1
      %s213 = scalar_select %p212, %s209, 1
      %s214 = smul.addr %s211, 8
      %s215 = sadd.s32 %s213, %s214
      %s216 = smul.addr %s215, 8
      %s217 = scalar_lea.vmem %s2, %s216
      %s218 = smul.u32 2, %s18
      %v219 = vld [vmem:[%s207] sm:$0xff]
      %v220 = vld [vmem:[%s197] sm:$0xff]
      %v221 = vld [vmem:[%s197 + $0x8] sm:$0xff]
      %v223 = vperm.slane %v219, 0
      %v224 = vperm.slane %v219, 4
      %v227 = vperm.slane %v223, 0
      %v228 = vperm.slane %v224, 0
      %v229 = vmul.f32 %v220, %v227
      %v230 = vmul.f32 %v221, %v228
      %231 = vst [vmem:[%s217] sm:$0xff] %v229
      %232 = vst [vmem:[%s217 + $0x8] sm:$0xff] %v230
      %v233 = vld [vmem:[%s197 + $0x10] sm:$0xff]
      %v234 = vld [vmem:[%s197 + $0x18] sm:$0xff]
      %v235 = vperm.slane %v219, 1
      %v236 = vperm.slane %v219, 5
      %v239 = vperm.slane %v235, 1
      %v240 = vperm.slane %v236, 1
      %v241 = vmul.f32 %v233, %v239
      %v242 = vmul.f32 %v234, %v240
      %243 = vst [vmem:[%s217 + $0x10] sm:$0xff] %v241
      %244 = vst [vmem:[%s217 + $0x18] sm:$0xff] %v242
      %v245 = vld [vmem:[%s197 + $0x20] sm:$0xff]
      %v246 = vld [vmem:[%s197 + $0x28] sm:$0xff]
      %v247 = vperm.slane %v219, 2
      %v248 = vperm.slane %v219, 6
      %v251 = vperm.slane %v247, 2
      %v252 = vperm.slane %v248, 2
      %v253 = vmul.f32 %v245, %v251
      %v254 = vmul.f32 %v246, %v252
      %255 = vst [vmem:[%s217 + $0x20] sm:$0xff] %v253
      %256 = vst [vmem:[%s217 + $0x28] sm:$0xff] %v254
      %v257 = vld [vmem:[%s197 + $0x30] sm:$0xff]
      %v258 = vld [vmem:[%s197 + $0x38] sm:$0xff]
      %v259 = vperm.slane %v219, 3
      %v260 = vperm.slane %v219, 7
      %v263 = vperm.slane %v259, 3
      %v264 = vperm.slane %v260, 3
      %v265 = vmul.f32 %v257, %v263
      %v266 = vmul.f32 %v258, %v264
      %267 = vst [vmem:[%s217 + $0x30] sm:$0xff] %v265
      %268 = vst [vmem:[%s217 + $0x38] sm:$0xff] %v266
      %s269 = smul.u32 2, %s18
      %p270 = scmp.lt.s32.totalorder %s17, 1
      %s271 = scalar_select %p270, %s17, 1
      %p272 = scmp.lt.s32.totalorder %s269, 1
      %s273 = scalar_select %p272, %s269, 1
      %s274 = smul.addr %s271, 8
      %s275 = sadd.s32 %s273, %s274
      %s276 = smul.addr %s275, 8
      %s277 = scalar_lea.vmem %s2, %s276
      // Predicated region
      $region29: #{uncertainty_attentive_reg.1} parent=27 // pred_check
        %p278 = pneg %p101
      $region30: #{uncertainty_attentive_reg.1} parent=27 // pred_check_branch
        %280 = sbr.rel (%p278) target = $region32
      $region31: #{uncertainty_attentive_reg.1} parent=27 // pred_region
        %s281 = smul.u32 2, %s18
      $region32: #{uncertainty_attentive_reg.1} parent=27 // pred_fallthru
        _
    $region28: #{uncertainty_attentive_reg.1} parent=5 // pred_fallthru
      _
    %p282 = scmp.le.s32.totalorder 2, %s8
    // Predicated region
    $region33: #{uncertainty_attentive_reg.1} parent=5 // pred_check
      %p283 = pneg %p282
    $region34: #{uncertainty_attentive_reg.1} parent=5 // pred_check_branch
      %285 = sbr.rel (%p283) target = $region36
    $region35: #{uncertainty_attentive_reg.1} parent=5 // pred_region
      %s286 = ssub.s32 %s8, 2
      // Predicated region
      $region37: #{uncertainty_attentive_reg.1} parent=35 // pred_check
        %p287 = pneg %p107
      $region38: #{uncertainty_attentive_reg.1} parent=35 // pred_check_branch
        %289 = sbr.rel (%p287) target = $region40
      $region39: #{uncertainty_attentive_reg.1} parent=35 // pred_region
        %s290 = smul.u32 2, %s20
        %p291 = scmp.lt.s32.totalorder %s19, 1
        %s292 = scalar_select %p291, %s19, 1
        %p293 = scmp.lt.s32.totalorder %s290, 1
        %s294 = scalar_select %p293, %s290, 1
        %s295 = smul.addr %s292, 8
        %s296 = sadd.s32 %s294, %s295
        %s297 = smul.addr %s296, 8
        %s298 = scalar_lea.vmem %s2, %s297
      $region40: #{uncertainty_attentive_reg.1} parent=35 // pred_fallthru
        _
    $region36: #{uncertainty_attentive_reg.1} parent=5 // pred_fallthru
      _
  $region6: #{uncertainty_attentive_reg.1} parent=0 // loop_footer
    %s12 = sadd.s32 1, %s8
  $region7: #{uncertainty_attentive_reg.1} parent=0 // loop_footer_branch
    %7 = sbr.rel target = $region3
  $region8: #{uncertainty_attentive_reg.1} parent=0 // loop_exit
    _

</llo_original>
